<compile_context>
chip_gen: v6e
topology: v6e:2x2x1
jax: 0.10.0
libtpu: 0.0.40
codegen_flags: <defaults>
</compile_context>

<pallas_src>
import functools

import jax
import jax.numpy as jnp
from jax.experimental import pallas as pl
from jax.experimental.pallas import tpu as pltpu


def st_gcn_kernel(x_ref, wg_ref, bg_ref, wtr_ref, vrow_ref, vcol_ref,
                  tmask_ref, bt_ref, o_ref, *, V, kt):
    rows = x_ref.shape[0]                    # spb * T (whole samples per block)
    pad = (kt - 1) // 2

    x = x_ref[...]                                            # (rows, V*Ci) f32

    # ---- Graph conv (1x1 conv + adjacency + BN1 folded into Wg/bg) + ReLU ----
    g = jnp.dot(x.astype(jnp.bfloat16), wg_ref[...],
                preferred_element_type=jnp.float32) + bg_ref[...]
    act = jnp.maximum(g, 0.0)                                 # (rows, V*Co) f32

    # ---- Temporal shifts: XLU sublane roll + precomputed boundary masks ----
    # (replaces the old S @ act shift matmuls; mask bakes in 'same' padding and
    #  per-sample boundaries so the roll wrap-around never leaks across rows)
    parts = []
    for dt in range(kt):
        d = dt - pad
        if d == 0:
            parts.append(act)
        else:
            # np.roll semantics: row r picks up act[(r + d) % rows]
            rolled = pltpu.roll(act, shift=(-d) % rows, axis=0)
            parts.append(rolled * tmask_ref[dt])              # (rows, 1) 0/1 mask
    stacked = jnp.concatenate(parts, axis=1).astype(jnp.bfloat16)  # (rows, kt*V*Co)

    # ---- Expand the tiny lane-tiled temporal weight into the stacked ----
    # ---- block-diagonal (kt*V*Co, V*Co) weight, entirely in VMEM        ----
    blk = (vrow_ref[...] == vcol_ref[...]).astype(jnp.bfloat16)    # kron(I_V, 1)
    wparts = []
    for dt in range(kt):
        tiled = jnp.concatenate([wtr_ref[dt]] * V, axis=0)         # (V*Co, V*Co)
        wparts.append(tiled * blk)                                 # zero cross-vertex
    wt_big = jnp.concatenate(wparts, axis=0)                       # (kt*V*Co, V*Co)

    # ---- Single wide-K temporal matmul + bias + identity residual + ReLU ----
    y = jnp.dot(stacked, wt_big, preferred_element_type=jnp.float32)
    o_ref[...] = jnp.maximum(x + bt_ref[...] + y, 0.0)


def fold_params(p, *, K, V):
    """Fold 1x1 conv + adjacency + BN scales into lane-dense matmul operands."""
    Ci = p['w1'].shape[0]
    Co = p['w1'].shape[1] // K
    s1, t1 = p['scale1'][0], p['shift1'][0]                 # (Co,)
    s2, t2 = p['scale2'][0], p['shift2'][0]                 # (Co,)

    # Graph conv: Wg[(v,ci),(w,co)] = sum_k w1[ci, k*Co+co] * A[k,v,w] * s1[co]
    w1r = p['w1'].reshape(Ci, K, Co)
    Wg = jnp.einsum('ckd,kvw->vcwd', w1r, p['A'])           # (V, Ci, V, Co)
    Wg = (Wg * s1[None, None, None, :]).reshape(V * Ci, V * Co)
    b1r = p['b1'].reshape(K, Co)
    bg = jnp.einsum('kd,kvw->wd', b1r, p['A'])              # (V, Co)
    bg = (bg * s1[None, :] + t1[None, :]).reshape(1, V * Co)

    # Temporal conv weight with BN2 scale folded, lane-tiled across vertices:
    #   wt_rep[dt, c, w*Co + d] = wt[dt, c, d] * s2[d]
    wt_s = p['wt'] * s2[None, None, :]                      # (kt, Co, Co)
    wt_rep = jnp.tile(wt_s, (1, 1, V))                      # (kt, Co, V*Co)
    bt = p['bt'][0] * s2 + t2                               # (Co,)
    bt = jnp.broadcast_to(bt[None, :], (V, Co)).reshape(1, V * Co)

    return (Wg.astype(jnp.bfloat16), bg.astype(jnp.float32),
            wt_rep.astype(jnp.bfloat16), bt.astype(jnp.float32))


def make_aux(N, T, V, Co, kt):
    """Tiny helper tensors: per-row temporal masks and per-lane vertex ids."""
    pad = (kt - 1) // 2
    tpos = jnp.arange(N * T, dtype=jnp.int32) % T
    masks = []
    for dt in range(kt):
        d = dt - pad
        keep = ((tpos + d) >= 0) & ((tpos + d) <= T - 1)    # 'same' pad + sample edges
        masks.append(keep.astype(jnp.float32))
    tmask = jnp.stack(masks, axis=0)[:, :, None]            # (kt, N*T, 1)
    vid = jnp.arange(V * Co, dtype=jnp.int32) // Co
    vrow = vid[:, None]                                     # (V*Co, 1)
    vcol = vid[None, :]                                     # (1, V*Co)
    return tmask, vrow, vcol


def st_gcn_forward(x, p, *, K, kt, max_block_rows=512):
    N, T, V, Ci = x.shape
    Co = p['scale1'].shape[-1]
    assert Ci == Co, "identity residual requires in_channels == out_channels"

    Wg, bg, wt_rep, bt = fold_params(p, K=K, V=V)
    tmask, vrow, vcol = make_aux(N, T, V, Co, kt)
    x2d = x.reshape(N * T, V * Ci).astype(jnp.float32)      # lane-dense slab

    # 1-D row grid over groups of whole samples (roll+mask stays exact per block).
    spb = min(N, max(1, max_block_rows // T))
    while N % spb != 0:
        spb -= 1
    if (spb * T) % 8 != 0:
        spb = N                          # whole-array block is always legal
    rows_b = spb * T
    grid = (N // spb,)

    kern = functools.partial(st_gcn_kernel, V=V, kt=kt)

    flops = (2 * N * T * (V * Ci) * (V * Co)
             + 2 * N * T * (kt * V * Co) * (V * Co))
    bytes_accessed = (N * T * V * Ci * 4 + (V * Ci) * (V * Co) * 2
                      + V * Co * 4 + kt * Co * V * Co * 2 + kt * N * T * 4
                      + V * Co * 4 + N * T * V * Co * 4)

    out2d = pl.pallas_call(
        kern,
        out_shape=jax.ShapeDtypeStruct((N * T, V * Co), jnp.float32),
        grid=grid,
        in_specs=[
            pl.BlockSpec((rows_b, V * Ci), lambda i: (i, 0)),     # x rows
            pl.BlockSpec((V * Ci, V * Co), lambda i: (0, 0)),     # Wg   (bf16)
            pl.BlockSpec((1, V * Co), lambda i: (0, 0)),          # bg   (f32)
            pl.BlockSpec((kt, Co, V * Co), lambda i: (0, 0, 0)),  # wt_rep (bf16)
            pl.BlockSpec((V * Co, 1), lambda i: (0, 0)),          # row vertex ids
            pl.BlockSpec((1, V * Co), lambda i: (0, 0)),          # col vertex ids
            pl.BlockSpec((kt, rows_b, 1), lambda i: (0, i, 0)),   # temporal masks
            pl.BlockSpec((1, V * Co), lambda i: (0, 0)),          # bt   (f32)
        ],
        out_specs=pl.BlockSpec((rows_b, V * Co), lambda i: (i, 0)),
        compiler_params=pltpu.CompilerParams(
            dimension_semantics=("parallel",)),
        cost_estimate=pl.CostEstimate(flops=flops, transcendentals=0,
                                      bytes_accessed=bytes_accessed),
    )(x2d, Wg, bg, wt_rep, vrow, vcol, tmask, bt)
    return out2d.reshape(N, T, V, Co)


def make_params(key, Ci, Co, K, kt, V):
    ks = jax.random.split(key, 13)
    eps = 1e-5
    # 1x1 conv: PyTorch weight (K*Co, Ci, 1, 1) stored as (Ci, K*Co); col = k*Co + c.
    w1 = 0.1 * jax.random.normal(ks[0], (Ci, K * Co), jnp.float32)
    b1 = 0.1 * jax.random.normal(ks[1], (1, K * Co), jnp.float32)
    A = 0.1 * jax.random.normal(ks[2], (K, V, V), jnp.float32)
    # BN1 (eval-mode, folded)
    g1 = 1.0 + 0.1 * jax.random.normal(ks[3], (Co,), jnp.float32)
    be1 = 0.1 * jax.random.normal(ks[4], (Co,), jnp.float32)
    rm1 = 0.1 * jax.random.normal(ks[5], (Co,), jnp.float32)
    rv1 = 1.0 + 0.1 * jax.random.uniform(ks[6], (Co,), jnp.float32)
    scale1 = (g1 / jnp.sqrt(rv1 + eps)).reshape(1, Co)
    shift1 = (be1 - rm1 * g1 / jnp.sqrt(rv1 + eps)).reshape(1, Co)
    # Temporal conv: PyTorch weight (Co, Co, kt, 1) stored as (kt, Cin, Cout).
    wt = 0.1 * jax.random.normal(ks[7], (kt, Co, Co), jnp.float32)
    bt = 0.1 * jax.random.normal(ks[8], (1, Co), jnp.float32)
    # BN2 (eval-mode, folded; running mean/var included)
    g2 = 1.0 + 0.1 * jax.random.normal(ks[9], (Co,), jnp.float32)
    be2 = 0.1 * jax.random.normal(ks[10], (Co,), jnp.float32)
    rm2 = 0.1 * jax.random.normal(ks[11], (Co,), jnp.float32)
    rv2 = 1.0 + 0.1 * jax.random.uniform(ks[12], (Co,), jnp.float32)
    scale2 = (g2 / jnp.sqrt(rv2 + eps)).reshape(1, Co)
    shift2 = (be2 - rm2 * g2 / jnp.sqrt(rv2 + eps)).reshape(1, Co)
    return dict(w1=w1, b1=b1, A=A, scale1=scale1, shift1=shift1,
                wt=wt, bt=bt, scale2=scale2, shift2=shift2)


def reference(x, p, *, K, kt):
    """Pure-JAX f32 reference of the same forward (channels-last layout)."""
    N, T, V, Ci = x.shape
    Co = p['scale1'].shape[-1]
    pad = (kt - 1) // 2
    h = jnp.einsum('ntvc,cd->ntvd', x, p['w1']) + p['b1'][0]
    h = h.reshape(N, T, V, K, Co)
    g = jnp.einsum('ntvkc,kvw->ntwc', h, p['A'])
    act = jnp.maximum(g * p['scale1'][0] + p['shift1'][0], 0.0)
    a_pad = jnp.pad(act, ((0, 0), (pad, pad), (0, 0), (0, 0)))
    y = jnp.zeros((N, T, V, Co), jnp.float32)
    for dt in range(kt):
        y = y + jnp.einsum('ntvc,cd->ntvd', a_pad[:, dt:dt + T], p['wt'][dt])
    y = y + p['bt'][0]
    y = y * p['scale2'][0] + p['shift2'][0]
    return jnp.maximum(y + x, 0.0)


if __name__ == "__main__":
    # st_gcn(in_channels=16, out_channels=16, kernel_size=(3, 3), stride=1, residual=True)
    N, C, T, V = 2, 16, 8, 16
    kt, K = 3, 3   # kernel_size = (temporal, spatial)

    key = jax.random.PRNGKey(0)
    kx, kp = jax.random.split(key)
    x = jax.random.normal(kx, (N, T, V, C), jnp.float32)   # NCHW (N,C,T,V) -> NTVC
    params = make_params(kp, C, C, K, kt, V)

    out = st_gcn_forward(x, params, K=K, kt=kt)
    out = jax.block_until_ready(out)

    ref = reference(x, params, K=K, kt=kt)
    assert out.shape == (N, T, V, C)
    max_err = float(jnp.max(jnp.abs(out - ref)))
    # bf16 MXU operands (f32 accumulation) => relaxed tolerance vs f32 reference.
    assert jnp.allclose(out, ref, atol=2e-2, rtol=2e-2), f"max_err={max_err}"
    print("KERNEL_OK")
</pallas_src>

<mosaic_0001>
module attributes {stable_mosaic.version = 11 : i64} {
  func.func @st_gcn_kernel(%arg0: i32, %arg1: memref<16x256xf32, #tpu.memory_space<vmem>>, %arg2: memref<256x256xbf16, #tpu.memory_space<vmem>>, %arg3: memref<1x256xf32, #tpu.memory_space<vmem>>, %arg4: memref<3x16x256xbf16, #tpu.memory_space<vmem>>, %arg5: memref<256x1xi32, #tpu.memory_space<vmem>>, %arg6: memref<1x256xi32, #tpu.memory_space<vmem>>, %arg7: memref<3x16x1xf32, #tpu.memory_space<vmem>>, %arg8: memref<1x256xf32, #tpu.memory_space<vmem>>, %arg9: memref<16x256xf32, #tpu.memory_space<vmem>>) attributes {dimension_semantics = [#tpu.dimension_semantics<parallel>], iteration_bounds = array<i64: 1>, scalar_prefetch = 0 : i64, scratch_operands = 0 : i64, tpu.core_type = #tpu.core_type<tc>, window_params = [{transform_indices = @transform_0, window_bounds = array<i64: 16, 256>}, {pipeline_mode = #tpu.pipeline_mode<synchronous>, transform_indices = @transform_1, window_bounds = array<i64: 256, 256>}, {pipeline_mode = #tpu.pipeline_mode<synchronous>, transform_indices = @transform_2, window_bounds = array<i64: 1, 256>}, {pipeline_mode = #tpu.pipeline_mode<synchronous>, transform_indices = @transform_3, window_bounds = array<i64: 3, 16, 256>}, {pipeline_mode = #tpu.pipeline_mode<synchronous>, transform_indices = @transform_4, window_bounds = array<i64: 256, 1>}, {pipeline_mode = #tpu.pipeline_mode<synchronous>, transform_indices = @transform_5, window_bounds = array<i64: 1, 256>}, {transform_indices = @transform_6, window_bounds = array<i64: 3, 16, 1>}, {pipeline_mode = #tpu.pipeline_mode<synchronous>, transform_indices = @transform_7, window_bounds = array<i64: 1, 256>}, {transform_indices = @transform_8, window_bounds = array<i64: 16, 256>}]} {
    %c0 = arith.constant 0 : index
    %c0_0 = arith.constant 0 : index
    %0 = vector.load %arg1[%c0, %c0_0] : memref<16x256xf32, #tpu.memory_space<vmem>>, vector<16x256xf32>
    %1 = arith.truncf %0 : vector<16x256xf32> to vector<16x256xbf16>
    %c0_1 = arith.constant 0 : index
    %c0_2 = arith.constant 0 : index
    %2 = vector.load %arg2[%c0_1, %c0_2] : memref<256x256xbf16, #tpu.memory_space<vmem>>, vector<256x256xbf16>
    %cst = arith.constant dense<0.000000e+00> : vector<16x256xf32>
    %3 = tpu.matmul %1, %2, %cst {dimension_numbers = #tpu.dot_dimension_numbers<[1], [0], [0], [1], [0, 0, 1, 1], [], []>} : vector<16x256xbf16>, vector<256x256xbf16>, vector<16x256xf32> -> vector<16x256xf32>
    %c0_3 = arith.constant 0 : index
    %c0_4 = arith.constant 0 : index
    %4 = vector.load %arg3[%c0_3, %c0_4] : memref<1x256xf32, #tpu.memory_space<vmem>>, vector<1x256xf32>
    %5 = vector.broadcast %4 : vector<1x256xf32> to vector<16x256xf32>
    %6 = arith.addf %3, %5 : vector<16x256xf32>
    %cst_5 = arith.constant 0.000000e+00 : f32
    %7 = vector.broadcast %cst_5 : f32 to vector<16x256xf32>
    %8 = arith.maximumf %6, %7 : vector<16x256xf32>
    %c1_i32 = arith.constant 1 : i32
    %9 = tpu.dynamic_rotate %8 by %c1_i32 dim 0 : vector<16x256xf32>, i32 -> vector<16x256xf32>
    %c0_6 = arith.constant 0 : index
    %c0_7 = arith.constant 0 : index
    %c0_8 = arith.constant 0 : index
    %10 = vector.load %arg7[%c0_6, %c0_7, %c0_8] : memref<3x16x1xf32, #tpu.memory_space<vmem>>, vector<1x16x1xf32>
    %11 = vector.shape_cast %10 : vector<1x16x1xf32> to vector<16x1xf32>
    %12 = vector.broadcast %11 : vector<16x1xf32> to vector<16x256xf32>
    %13 = arith.mulf %9, %12 : vector<16x256xf32>
    %c15_i32 = arith.constant 15 : i32
    %14 = tpu.dynamic_rotate %8 by %c15_i32 dim 0 : vector<16x256xf32>, i32 -> vector<16x256xf32>
    %c2 = arith.constant 2 : index
    %c0_9 = arith.constant 0 : index
    %c0_10 = arith.constant 0 : index
    %15 = vector.load %arg7[%c2, %c0_9, %c0_10] : memref<3x16x1xf32, #tpu.memory_space<vmem>>, vector<1x16x1xf32>
    %16 = vector.shape_cast %15 : vector<1x16x1xf32> to vector<16x1xf32>
    %17 = vector.broadcast %16 : vector<16x1xf32> to vector<16x256xf32>
    %18 = arith.mulf %14, %17 : vector<16x256xf32>
    %19 = tpu.concatenate %13, %8, %18 in 1 : vector<16x256xf32>, vector<16x256xf32>, vector<16x256xf32> -> vector<16x768xf32>
    %20 = arith.truncf %19 : vector<16x768xf32> to vector<16x768xbf16>
    %c0_11 = arith.constant 0 : index
    %c0_12 = arith.constant 0 : index
    %21 = vector.load %arg5[%c0_11, %c0_12] : memref<256x1xi32, #tpu.memory_space<vmem>>, vector<256x1xi32>
    %c0_13 = arith.constant 0 : index
    %c0_14 = arith.constant 0 : index
    %22 = vector.load %arg6[%c0_13, %c0_14] : memref<1x256xi32, #tpu.memory_space<vmem>>, vector<1x256xi32>
    %23 = vector.broadcast %21 : vector<256x1xi32> to vector<256x256xi32>
    %24 = vector.broadcast %22 : vector<1x256xi32> to vector<256x256xi32>
    %25 = arith.cmpi eq, %23, %24 : vector<256x256xi32>
    %26 = arith.extui %25 : vector<256x256xi1> to vector<256x256xi32>
    %27 = arith.sitofp %26 : vector<256x256xi32> to vector<256x256xf32>
    %28 = arith.truncf %27 : vector<256x256xf32> to vector<256x256xbf16>
    %c0_15 = arith.constant 0 : index
    %c0_16 = arith.constant 0 : index
    %c0_17 = arith.constant 0 : index
    %29 = vector.load %arg4[%c0_15, %c0_16, %c0_17] : memref<3x16x256xbf16, #tpu.memory_space<vmem>>, vector<1x16x256xbf16>
    %30 = vector.shape_cast %29 : vector<1x16x256xbf16> to vector<16x256xbf16>
    %31 = tpu.concatenate %30, %30, %30, %30, %30, %30, %30, %30, %30, %30, %30, %30, %30, %30, %30, %30 in 0 : vector<16x256xbf16>, vector<16x256xbf16>, vector<16x256xbf16>, vector<16x256xbf16>, vector<16x256xbf16>, vector<16x256xbf16>, vector<16x256xbf16>, vector<16x256xbf16>, vector<16x256xbf16>, vector<16x256xbf16>, vector<16x256xbf16>, vector<16x256xbf16>, vector<16x256xbf16>, vector<16x256xbf16>, vector<16x256xbf16>, vector<16x256xbf16> -> vector<256x256xbf16>
    %32 = arith.mulf %31, %28 : vector<256x256xbf16>
    %c1 = arith.constant 1 : index
    %c0_18 = arith.constant 0 : index
    %c0_19 = arith.constant 0 : index
    %33 = vector.load %arg4[%c1, %c0_18, %c0_19] : memref<3x16x256xbf16, #tpu.memory_space<vmem>>, vector<1x16x256xbf16>
    %34 = vector.shape_cast %33 : vector<1x16x256xbf16> to vector<16x256xbf16>
    %35 = tpu.concatenate %34, %34, %34, %34, %34, %34, %34, %34, %34, %34, %34, %34, %34, %34, %34, %34 in 0 : vector<16x256xbf16>, vector<16x256xbf16>, vector<16x256xbf16>, vector<16x256xbf16>, vector<16x256xbf16>, vector<16x256xbf16>, vector<16x256xbf16>, vector<16x256xbf16>, vector<16x256xbf16>, vector<16x256xbf16>, vector<16x256xbf16>, vector<16x256xbf16>, vector<16x256xbf16>, vector<16x256xbf16>, vector<16x256xbf16>, vector<16x256xbf16> -> vector<256x256xbf16>
    %36 = arith.mulf %35, %28 : vector<256x256xbf16>
    %c2_20 = arith.constant 2 : index
    %c0_21 = arith.constant 0 : index
    %c0_22 = arith.constant 0 : index
    %37 = vector.load %arg4[%c2_20, %c0_21, %c0_22] : memref<3x16x256xbf16, #tpu.memory_space<vmem>>, vector<1x16x256xbf16>
    %38 = vector.shape_cast %37 : vector<1x16x256xbf16> to vector<16x256xbf16>
    %39 = tpu.concatenate %38, %38, %38, %38, %38, %38, %38, %38, %38, %38, %38, %38, %38, %38, %38, %38 in 0 : vector<16x256xbf16>, vector<16x256xbf16>, vector<16x256xbf16>, vector<16x256xbf16>, vector<16x256xbf16>, vector<16x256xbf16>, vector<16x256xbf16>, vector<16x256xbf16>, vector<16x256xbf16>, vector<16x256xbf16>, vector<16x256xbf16>, vector<16x256xbf16>, vector<16x256xbf16>, vector<16x256xbf16>, vector<16x256xbf16>, vector<16x256xbf16> -> vector<256x256xbf16>
    %40 = arith.mulf %39, %28 : vector<256x256xbf16>
    %41 = tpu.concatenate %32, %36, %40 in 0 : vector<256x256xbf16>, vector<256x256xbf16>, vector<256x256xbf16> -> vector<768x256xbf16>
    %cst_23 = arith.constant dense<0.000000e+00> : vector<16x256xf32>
    %42 = tpu.matmul %20, %41, %cst_23 {dimension_numbers = #tpu.dot_dimension_numbers<[1], [0], [0], [1], [0, 0, 1, 1], [], []>} : vector<16x768xbf16>, vector<768x256xbf16>, vector<16x256xf32> -> vector<16x256xf32>
    %c0_24 = arith.constant 0 : index
    %c0_25 = arith.constant 0 : index
    %43 = vector.load %arg8[%c0_24, %c0_25] : memref<1x256xf32, #tpu.memory_space<vmem>>, vector<1x256xf32>
    %44 = vector.broadcast %43 : vector<1x256xf32> to vector<16x256xf32>
    %45 = arith.addf %0, %44 : vector<16x256xf32>
    %46 = arith.addf %45, %42 : vector<16x256xf32>
    %cst_26 = arith.constant 0.000000e+00 : f32
    %47 = vector.broadcast %cst_26 : f32 to vector<16x256xf32>
    %48 = arith.maximumf %46, %47 : vector<16x256xf32>
    %c0_27 = arith.constant 0 : index
    %c0_28 = arith.constant 0 : index
    %49 = vector.load %arg9[%c0_27, %c0_28] : memref<16x256xf32, #tpu.memory_space<vmem>>, vector<16x256xf32>
    tpu.vector_store %arg9[%c0_27, %c0_28], %48 {strides = array<i32>} : memref<16x256xf32, #tpu.memory_space<vmem>>, vector<16x256xf32>,
    return
  }
  func.func @transform_0(%arg0: i32) -> (i32, i32) {
    %c0_i32 = arith.constant 0 : i32
    %c0_i32_0 = arith.constant 0 : i32
    return %arg0, %c0_i32 : i32, i32
  }
  func.func @transform_1(%arg0: i32) -> (i32, i32) {
    %c0_i32 = arith.constant 0 : i32
    %c0_i32_0 = arith.constant 0 : i32
    %c0_i32_1 = arith.constant 0 : i32
    return %c0_i32, %c0_i32_0 : i32, i32
  }
  func.func @transform_2(%arg0: i32) -> (i32, i32) {
    %c0_i32 = arith.constant 0 : i32
    %c0_i32_0 = arith.constant 0 : i32
    %c0_i32_1 = arith.constant 0 : i32
    return %c0_i32, %c0_i32_0 : i32, i32
  }
  func.func @transform_3(%arg0: i32) -> (i32, i32, i32) {
    %c0_i32 = arith.constant 0 : i32
    %c0_i32_0 = arith.constant 0 : i32
    %c0_i32_1 = arith.constant 0 : i32
    %c0_i32_2 = arith.constant 0 : i32
    return %c0_i32, %c0_i32_0, %c0_i32_1 : i32, i32, i32
  }
  func.func @transform_4(%arg0: i32) -> (i32, i32) {
    %c0_i32 = arith.constant 0 : i32
    %c0_i32_0 = arith.constant 0 : i32
    %c0_i32_1 = arith.constant 0 : i32
    return %c0_i32, %c0_i32_0 : i32, i32
  }
  func.func @transform_5(%arg0: i32) -> (i32, i32) {
    %c0_i32 = arith.constant 0 : i32
    %c0_i32_0 = arith.constant 0 : i32
    %c0_i32_1 = arith.constant 0 : i32
    return %c0_i32, %c0_i32_0 : i32, i32
  }
  func.func @transform_6(%arg0: i32) -> (i32, i32, i32) {
    %c0_i32 = arith.constant 0 : i32
    %c0_i32_0 = arith.constant 0 : i32
    %c0_i32_1 = arith.constant 0 : i32
    return %c0_i32, %arg0, %c0_i32_0 : i32, i32, i32
  }
  func.func @transform_7(%arg0: i32) -> (i32, i32) {
    %c0_i32 = arith.constant 0 : i32
    %c0_i32_0 = arith.constant 0 : i32
    %c0_i32_1 = arith.constant 0 : i32
    return %c0_i32, %c0_i32_0 : i32, i32
  }
  func.func @transform_8(%arg0: i32) -> (i32, i32) {
    %c0_i32 = arith.constant 0 : i32
    %c0_i32_0 = arith.constant 0 : i32
    return %arg0, %c0_i32 : i32, i32
  }
}

</mosaic_0001>

<llo_original>
// kernel: tpu_custom_call.1
$region0: #{tpu_custom_call.1}
  #allocation0 [shape = 'u32[]', space=smem, size = 0x4, offset = 0x4, fixed_abs, tag = 'smem constant byte address 0x4 - core index']
  #allocation1 [shape = 'u32[144,128]{1,0:T(1,128)}', space=vmem, size = 0x12000, scoped, tag = 'internal scratch']
  %s0 = inlined_call_operand.hbm [shape: f32[16,256], index: 0, kind: input, shape index: {}]
  %s1 = inlined_call_operand.vmem [shape: bf16[256,256], index: 1, kind: input, shape index: {}]
  %s2 = inlined_call_operand.vmem [shape: f32[1,256], index: 2, kind: input, shape index: {}]
  %s3 = inlined_call_operand.vmem [shape: bf16[3,16,256], index: 3, kind: input, shape index: {}]
  %s4 = inlined_call_operand.vmem [shape: s32[256,1], index: 4, kind: input, shape index: {}]
  %s5 = inlined_call_operand.vmem [shape: s32[1,256], index: 5, kind: input, shape index: {}]
  %s6 = inlined_call_operand.vmem [shape: f32[3,16,1], index: 6, kind: input, shape index: {}]
  %s7 = inlined_call_operand.vmem [shape: f32[1,256], index: 7, kind: input, shape index: {}]
  %s8 = inlined_call_operand.hbm [shape: f32[16,256], index: 8, kind: output, shape index: {}]
  %s9 = sld [smem:[#allocation0]]
  $region46: #{tpu_custom_call.1} parent=0
    _
  %s11 = ssub.s32 1, %s9
  %s12 = scalar_select 0, %s11, %s9
  $region1: #{tpu_custom_call.1} parent=0
    #allocation2 [shape = 'u8[16384]{0}', space=vmem, size = 0x4000, scoped, tag = 'input window, operand 0, single buffered']
    #allocation3 [shape = 's32[1]{0}', space=sflag, size = 0x4, scoped, tag = 'scoped memory for tpu_custom_call.1']
    #allocation4 [shape = 's32[1]{0}', space=sflag, size = 0x4, scoped, tag = 'scoped memory for tpu_custom_call.1']
    #allocation5 [shape = 'u8[16384]{0}', space=vmem, size = 0x4000, scoped, tag = 'output window, operand 0, single buffered']
    %13 = vsyncpa [#allocation3], 0
    %14 = vsyncpa [#allocation4], 0
    // Predicated region
    $region2: #{tpu_custom_call.1} parent=1 // pred_check
      _
    $region3: #{tpu_custom_call.1} parent=1 // pred_check_branch
      %16 = sbr.rel (0) target = $region5
    $region4: #{tpu_custom_call.1} parent=1 // pred_region
      %s18 = ssub.s32 512, 512
      %19 = vsyncadd [#allocation3], %s18
      %s20 = sshll.u32 [#allocation2], 4
      %s21 = int_to_ptr.vmem [resolvable:$true] %s20
      %26 = dma.hbm_to_vmem [thread:$0]  %s0, 512, %s21, [#allocation3], 256, 256, 16
    $region5: #{tpu_custom_call.1} parent=1 // pred_fallthru
      _
    // Predicated region
    $region6: #{tpu_custom_call.1} parent=1 // pred_check
      _
    $region7: #{tpu_custom_call.1} parent=1 // pred_check_branch
      %28 = sbr.rel (0) target = $region9
    $region8: #{tpu_custom_call.1} parent=1 // pred_region
      _
    $region9: #{tpu_custom_call.1} parent=1 // pred_fallthru
      _
    // Predicated region
    $region10: #{tpu_custom_call.1} parent=1 // pred_check
      _
    $region11: #{tpu_custom_call.1} parent=1 // pred_check_branch
      %30 = sbr.rel (0) target = $region13
    $region12: #{tpu_custom_call.1} parent=1 // pred_region
      _
    $region13: #{tpu_custom_call.1} parent=1 // pred_fallthru
      _
    // Predicated region
    $region14: #{tpu_custom_call.1} parent=1 // pred_check
      _
    $region15: #{tpu_custom_call.1} parent=1 // pred_check_branch
      %32 = sbr.rel (0) target = $region17
    $region16: #{tpu_custom_call.1} parent=1 // pred_region
      _
    $region17: #{tpu_custom_call.1} parent=1 // pred_fallthru
      _
    // Predicated region
    $region18: #{tpu_custom_call.1} parent=1 // pred_check
      _
    $region19: #{tpu_custom_call.1} parent=1 // pred_check_branch
      %34 = sbr.rel (0) target = $region21
    $region20: #{tpu_custom_call.1} parent=1 // pred_region
      _
    $region21: #{tpu_custom_call.1} parent=1 // pred_fallthru
      _
    // Predicated region
    $region22: #{tpu_custom_call.1} parent=1 // pred_check
      _
    $region23: #{tpu_custom_call.1} parent=1 // pred_check_branch
      %36 = sbr.rel (0) target = $region25
    $region24: #{tpu_custom_call.1} parent=1 // pred_region
      _
    $region25: #{tpu_custom_call.1} parent=1 // pred_fallthru
      _
    // Predicated region
    $region26: #{tpu_custom_call.1} parent=1 // pred_check
      _
    $region27: #{tpu_custom_call.1} parent=1 // pred_check_branch
      %38 = sbr.rel (0) target = $region29
    $region28: #{tpu_custom_call.1} parent=1 // pred_region
      _
    $region29: #{tpu_custom_call.1} parent=1 // pred_fallthru
      _
    // Predicated region
    $region30: #{tpu_custom_call.1} parent=1 // pred_check
      _
    $region31: #{tpu_custom_call.1} parent=1 // pred_check_branch
      %40 = sbr.rel (0) target = $region33
    $region32: #{tpu_custom_call.1} parent=1 // pred_region
      _
    $region33: #{tpu_custom_call.1} parent=1 // pred_fallthru
      _
    // Predicated region
    $region34: #{tpu_custom_call.1} parent=1 // pred_check
      _
    $region35: #{tpu_custom_call.1} parent=1 // pred_check_branch
      %42 = sbr.rel (0) target = $region37
    $region36: #{tpu_custom_call.1} parent=1 // pred_region
      %43 = dma.done [#allocation3], 512
    $region37: #{tpu_custom_call.1} parent=1 // pred_fallthru
      _
    %v44 = vld [vmem:[#allocation2] sm:$0xff]
    %v45 = vld [vmem:[#allocation2 + $0x8] sm:$0xff]
    %v46 = vld [vmem:[#allocation2 + $0x10] sm:$0xff]
    %v47 = vld [vmem:[#allocation2 + $0x18] sm:$0xff]
    %v48 = vpack.c.bf16 %v46, %v44
    %v49 = vpack.c.bf16 %v47, %v45
    %v50 = vld [vmem:[%s1] sm:$0xff]
    %v51 = vld [vmem:[%s1 + $0x8] sm:$0xff]
    %v52 = vld [vmem:[%s1 + $0x10] sm:$0xff]
    %v53 = vld [vmem:[%s1 + $0x18] sm:$0xff]
    %v54 = vld [vmem:[%s1 + $0x20] sm:$0xff]
    %v55 = vld [vmem:[%s1 + $0x28] sm:$0xff]
    %v56 = vld [vmem:[%s1 + $0x30] sm:$0xff]
    %v57 = vld [vmem:[%s1 + $0x38] sm:$0xff]
    %v58 = vld [vmem:[%s1 + $0x40] sm:$0xff]
    %v59 = vld [vmem:[%s1 + $0x48] sm:$0xff]
    %v60 = vld [vmem:[%s1 + $0x50] sm:$0xff]
    %v61 = vld [vmem:[%s1 + $0x58] sm:$0xff]
    %v62 = vld [vmem:[%s1 + $0x60] sm:$0xff]
    %v63 = vld [vmem:[%s1 + $0x68] sm:$0xff]
    %v64 = vld [vmem:[%s1 + $0x70] sm:$0xff]
    %v65 = vld [vmem:[%s1 + $0x78] sm:$0xff]
    %v66 = vld [vmem:[%s1 + $0x80] sm:$0xff]
    %v67 = vld [vmem:[%s1 + $0x88] sm:$0xff]
    %v68 = vld [vmem:[%s1 + $0x90] sm:$0xff]
    %v69 = vld [vmem:[%s1 + $0x98] sm:$0xff]
    %v70 = vld [vmem:[%s1 + $0xa0] sm:$0xff]
    %v71 = vld [vmem:[%s1 + $0xa8] sm:$0xff]
    %v72 = vld [vmem:[%s1 + $0xb0] sm:$0xff]
    %v73 = vld [vmem:[%s1 + $0xb8] sm:$0xff]
    %v74 = vld [vmem:[%s1 + $0xc0] sm:$0xff]
    %v75 = vld [vmem:[%s1 + $0xc8] sm:$0xff]
    %v76 = vld [vmem:[%s1 + $0xd0] sm:$0xff]
    %v77 = vld [vmem:[%s1 + $0xd8] sm:$0xff]
    %v78 = vld [vmem:[%s1 + $0xe0] sm:$0xff]
    %v79 = vld [vmem:[%s1 + $0xe8] sm:$0xff]
    %v80 = vld [vmem:[%s1 + $0xf0] sm:$0xff]
    %v81 = vld [vmem:[%s1 + $0xf8] sm:$0xff]
    %v82 = vld [vmem:[%s2] sm:$0x3]
    %v84 = vlaneseq
    %v85 = vshrl.u32 %v84, 7
    %v86 = vsub.s32 0, %v85
    %v87 = vrot.slane %v82, %v86
    %v88 = vlaneseq
    %v89 = vshrl.u32 %v88, 7
    %v90 = vsub.s32 1, %v89
    %v91 = vrot.slane %v82, %v90
    %v126 = vunpack.c.l.b16 %v50
    %v127 = vunpack.c.h.b16 %v50
    %v128 = vunpack.c.l.b16 %v51
    %v129 = vunpack.c.h.b16 %v51
    %v130 = vunpack.c.l.b16 %v52
    %v131 = vunpack.c.h.b16 %v52
    %v132 = vunpack.c.l.b16 %v53
    %v133 = vunpack.c.h.b16 %v53
    %v134 = vunpack.c.l.b16 %v54
    %v135 = vunpack.c.h.b16 %v54
    %v136 = vunpack.c.l.b16 %v55
    %v137 = vunpack.c.h.b16 %v55
    %v138 = vunpack.c.l.b16 %v56
    %v139 = vunpack.c.h.b16 %v56
    %v140 = vunpack.c.l.b16 %v57
    %v141 = vunpack.c.h.b16 %v57
    %v142 = vunpack.c.l.b16 %v58
    %v143 = vunpack.c.h.b16 %v58
    %v144 = vunpack.c.l.b16 %v59
    %v145 = vunpack.c.h.b16 %v59
    %v146 = vunpack.c.l.b16 %v60
    %v147 = vunpack.c.h.b16 %v60
    %v148 = vunpack.c.l.b16 %v61
    %v149 = vunpack.c.h.b16 %v61
    %v150 = vunpack.c.l.b16 %v62
    %v151 = vunpack.c.h.b16 %v62
    %v152 = vunpack.c.l.b16 %v63
    %v153 = vunpack.c.h.b16 %v63
    %v154 = vunpack.c.l.b16 %v64
    %v155 = vunpack.c.h.b16 %v64
    %v156 = vunpack.c.l.b16 %v65
    %v157 = vunpack.c.h.b16 %v65
    %v158 = vunpack.c.l.b16 %v66
    %v159 = vunpack.c.h.b16 %v66
    %v160 = vunpack.c.l.b16 %v67
    %v161 = vunpack.c.h.b16 %v67
    %v162 = vunpack.c.l.b16 %v68
    %v163 = vunpack.c.h.b16 %v68
    %v164 = vunpack.c.l.b16 %v69
    %v165 = vunpack.c.h.b16 %v69
    %v166 = vunpack.c.l.b16 %v70
    %v167 = vunpack.c.h.b16 %v70
    %v168 = vunpack.c.l.b16 %v71
    %v169 = vunpack.c.h.b16 %v71
    %v170 = vunpack.c.l.b16 %v72
    %v171 = vunpack.c.h.b16 %v72
    %v172 = vunpack.c.l.b16 %v73
    %v173 = vunpack.c.h.b16 %v73
    %v174 = vunpack.c.l.b16 %v74
    %v175 = vunpack.c.h.b16 %v74
    %v176 = vunpack.c.l.b16 %v75
    %v177 = vunpack.c.h.b16 %v75
    %v178 = vunpack.c.l.b16 %v76
    %v179 = vunpack.c.h.b16 %v76
    %v180 = vunpack.c.l.b16 %v77
    %v181 = vunpack.c.h.b16 %v77
    %v182 = vunpack.c.l.b16 %v78
    %v183 = vunpack.c.h.b16 %v78
    %v184 = vunpack.c.l.b16 %v79
    %v185 = vunpack.c.h.b16 %v79
    %v186 = vunpack.c.l.b16 %v80
    %v187 = vunpack.c.h.b16 %v80
    %v188 = vunpack.c.l.b16 %v81
    %v189 = vunpack.c.h.b16 %v81
    %v190 = vpack.c.b16 %v128, %v126
    %v191 = vpack.c.b16 %v129, %v127
    %v192 = vpack.c.b16 %v132, %v130
    %v193 = vpack.c.b16 %v133, %v131
    %v194 = vpack.c.b16 %v136, %v134
    %v195 = vpack.c.b16 %v137, %v135
    %v196 = vpack.c.b16 %v140, %v138
    %v197 = vpack.c.b16 %v141, %v139
    %v198 = vpack.c.b16 %v144, %v142
    %v199 = vpack.c.b16 %v145, %v143
    %v200 = vpack.c.b16 %v148, %v146
    %v201 = vpack.c.b16 %v149, %v147
    %v202 = vpack.c.b16 %v152, %v150
    %v203 = vpack.c.b16 %v153, %v151
    %v204 = vpack.c.b16 %v156, %v154
    %v205 = vpack.c.b16 %v157, %v155
    %v206 = vpack.c.b16 %v160, %v158
    %v207 = vpack.c.b16 %v161, %v159
    %v208 = vpack.c.b16 %v164, %v162
    %v209 = vpack.c.b16 %v165, %v163
    %v210 = vpack.c.b16 %v168, %v166
    %v211 = vpack.c.b16 %v169, %v167
    %v212 = vpack.c.b16 %v172, %v170
    %v213 = vpack.c.b16 %v173, %v171
    %v214 = vpack.c.b16 %v176, %v174
    %v215 = vpack.c.b16 %v177, %v175
    %v216 = vpack.c.b16 %v180, %v178
    %v217 = vpack.c.b16 %v181, %v179
    %v218 = vpack.c.b16 %v184, %v182
    %v219 = vpack.c.b16 %v185, %v183
    %v220 = vpack.c.b16 %v188, %v186
    %v221 = vpack.c.b16 %v189, %v187
    %254 = vmatprep.subr.bf16.mxu0 %v205
    %255 = vmatpush1.bf16.msra.mxu0 %v204
    %256 = vmatprep.subr.bf16.mxu0 %v203
    %257 = vmatpush1.bf16.msra.mxu0 %v202
    %258 = vmatprep.subr.bf16.mxu0 %v201
    %259 = vmatpush1.bf16.msra.mxu0 %v200
    %260 = vmatprep.subr.bf16.mxu0 %v199
    %261 = vmatpush1.bf16.msra.mxu0 %v198
    %262 = vmatprep.subr.bf16.mxu0 %v197
    %263 = vmatpush1.bf16.msra.mxu0 %v196
    %264 = vmatprep.subr.bf16.mxu0 %v195
    %265 = vmatpush1.bf16.msra.mxu0 %v194
    %266 = vmatprep.subr.bf16.mxu0 %v193
    %267 = vmatpush1.bf16.msra.mxu0 %v192
    %268 = vmatprep.subr.bf16.mxu0 %v191
    %269 = vmatpush1.bf16.msra.mxu0 %v190
    %270 = vmatprep.subr.bf16.mxu0 %v221
    %271 = vmatpush2.bf16.msra.mxu0 %v220
    %272 = vmatprep.subr.bf16.mxu0 %v219
    %273 = vmatpush2.bf16.msra.mxu0 %v218
    %274 = vmatprep.subr.bf16.mxu0 %v217
    %275 = vmatpush2.bf16.msra.mxu0 %v216
    %276 = vmatprep.subr.bf16.mxu0 %v215
    %277 = vmatpush2.bf16.msra.mxu0 %v214
    %278 = vmatprep.subr.bf16.mxu0 %v213
    %279 = vmatpush2.bf16.msra.mxu0 %v212
    %280 = vmatprep.subr.bf16.mxu0 %v211
    %281 = vmatpush2.bf16.msra.mxu0 %v210
    %282 = vmatprep.subr.bf16.mxu0 %v209
    %283 = vmatpush2.bf16.msra.mxu0 %v208
    %284 = vmatprep.subr.bf16.mxu0 %v207
    %285 = vmatpush2.bf16.msra.mxu0 %v206
    %286 = vmatprep.mubr.bf16.mxu0 %v49
    %287 = vmatmul.mubr.bf16.gmra.mxu0 %v48
    %v288 = vpop.f32.mrf.mxu0
    %v289 = vadd.f32 %v87, %v288
    %v290 = vpop.f32.mrf.mxu0
    %v291 = vadd.f32 %v91, %v290
    %v292 = vpop.f32.mrf.mxu0
    %v293 = vadd.f32 %v87, %v292
    %v294 = vpop.f32.mrf.mxu0
    %v295 = vadd.f32 %v91, %v294
    %296 = vdwg.mxu0
    %v297 = vmax.f32 %v289, 0.0
    %v298 = vmax.f32 %v291, 0.0
    %v299 = vmax.f32 %v293, 0.0
    %v300 = vmax.f32 %v295, 0.0
    %v301 = vrot.slane %v297, 7
    %v302 = vrot.slane %v298, 7
    %v303 = vrot.slane %v299, 7
    %v304 = vrot.slane %v300, 7
    %v305 = vlaneseq
    %v306 = vshrl.u32 %v305, 7
    %vm307 = vcmp.lt.s32.totalorder %v306, 1
    %v308 = vsel %vm307, %v301, %v303
    %v309 = vsel %vm307, %v302, %v304
    %v310 = vsel %vm307, %v303, %v301
    %v311 = vsel %vm307, %v304, %v302
    %v312 = vld [vmem:[%s6] sm:$0xff]
    %v313 = vld [vmem:[%s6 + $0x8] sm:$0xff]
    %315 = vset.pattern.permute.xlu0 0
    %316 = vperm.xlu0 %315, %v312
    %v317 = vpop.permute.xlu0 %316
    %320 = vset.pattern.permute.xlu0 0
    %321 = vperm.xlu0 %320, %v313
    %v322 = vpop.permute.xlu0 %321
    %v324 = vmul.f32 %v310, %v317
    %v325 = vmul.f32 %v311, %v317
    %v326 = vmul.f32 %v308, %v322
    %v327 = vmul.f32 %v309, %v322
    %v328 = vrot.slane %v297, 1
    %v329 = vrot.slane %v298, 1
    %v330 = vrot.slane %v299, 1
    %v331 = vrot.slane %v300, 1
    %vm332 = vcmp.lt.s32.totalorder %v306, 7
    %v333 = vsel %vm332, %v328, %v330
    %v334 = vsel %vm332, %v329, %v331
    %v335 = vsel %vm332, %v330, %v328
    %v336 = vsel %vm332, %v331, %v329
    %s337 = scalar_lea.vmem %s6, 32
    %v338 = vld [vmem:[%s337] sm:$0xff]
    %v339 = vld [vmem:[%s337 + $0x8] sm:$0xff]
    %341 = vset.pattern.permute.xlu0 0
    %342 = vperm.xlu0 %341, %v338
    %v343 = vpop.permute.xlu0 %342
    %346 = vset.pattern.permute.xlu0 0
    %347 = vperm.xlu0 %346, %v339
    %v348 = vpop.permute.xlu0 %347
    %v350 = vmul.f32 %v333, %v343
    %v351 = vmul.f32 %v334, %v343
    %v352 = vmul.f32 %v335, %v348
    %v353 = vmul.f32 %v336, %v348
    %v354 = vpack.c.bf16 %v326, %v324
    %v355 = vpack.c.bf16 %v327, %v325
    %v356 = vpack.c.bf16 %v299, %v297
    %v357 = vpack.c.bf16 %v300, %v298
    %v358 = vpack.c.bf16 %v352, %v350
    %v359 = vpack.c.bf16 %v353, %v351
    %v360 = vld [vmem:[%s4] sm:$0xff]
    %v361 = vld [vmem:[%s4 + $0x8] sm:$0xff]
    %v362 = vld [vmem:[%s4 + $0x10] sm:$0xff]
    %v363 = vld [vmem:[%s4 + $0x18] sm:$0xff]
    %v364 = vld [vmem:[%s4 + $0x20] sm:$0xff]
    %v365 = vld [vmem:[%s4 + $0x28] sm:$0xff]
    %v366 = vld [vmem:[%s4 + $0x30] sm:$0xff]
    %v367 = vld [vmem:[%s4 + $0x38] sm:$0xff]
    %v368 = vld [vmem:[%s4 + $0x40] sm:$0xff]
    %v369 = vld [vmem:[%s4 + $0x48] sm:$0xff]
    %v370 = vld [vmem:[%s4 + $0x50] sm:$0xff]
    %v371 = vld [vmem:[%s4 + $0x58] sm:$0xff]
    %v372 = vld [vmem:[%s4 + $0x60] sm:$0xff]
    %v373 = vld [vmem:[%s4 + $0x68] sm:$0xff]
    %v374 = vld [vmem:[%s4 + $0x70] sm:$0xff]
    %v375 = vld [vmem:[%s4 + $0x78] sm:$0xff]
    %v376 = vld [vmem:[%s4 + $0x80] sm:$0xff]
    %v377 = vld [vmem:[%s4 + $0x88] sm:$0xff]
    %v378 = vld [vmem:[%s4 + $0x90] sm:$0xff]
    %v379 = vld [vmem:[%s4 + $0x98] sm:$0xff]
    %v380 = vld [vmem:[%s4 + $0xa0] sm:$0xff]
    %v381 = vld [vmem:[%s4 + $0xa8] sm:$0xff]
    %v382 = vld [vmem:[%s4 + $0xb0] sm:$0xff]
    %v383 = vld [vmem:[%s4 + $0xb8] sm:$0xff]
    %v384 = vld [vmem:[%s4 + $0xc0] sm:$0xff]
    %v385 = vld [vmem:[%s4 + $0xc8] sm:$0xff]
    %v386 = vld [vmem:[%s4 + $0xd0] sm:$0xff]
    %v387 = vld [vmem:[%s4 + $0xd8] sm:$0xff]
    %v388 = vld [vmem:[%s4 + $0xe0] sm:$0xff]
    %v389 = vld [vmem:[%s4 + $0xe8] sm:$0xff]
    %v390 = vld [vmem:[%s4 + $0xf0] sm:$0xff]
    %v391 = vld [vmem:[%s4 + $0xf8] sm:$0xff]
    %v392 = vld [vmem:[%s5] sm:$0x3]
    %393 = vset.pattern.permute.xlu0 0
    %394 = vperm.xlu0 %393, %v360
    %v395 = vpop.permute.xlu0 %394
    %396 = vset.pattern.permute.xlu0 0
    %397 = vperm.xlu0 %396, %v361
    %v398 = vpop.permute.xlu0 %397
    %399 = vset.pattern.permute.xlu0 0
    %400 = vperm.xlu0 %399, %v362
    %v401 = vpop.permute.xlu0 %400
    %402 = vset.pattern.permute.xlu0 0
    %403 = vperm.xlu0 %402, %v363
    %v404 = vpop.permute.xlu0 %403
    %405 = vset.pattern.permute.xlu0 0
    %406 = vperm.xlu0 %405, %v364
    %v407 = vpop.permute.xlu0 %406
    %408 = vset.pattern.permute.xlu0 0
    %409 = vperm.xlu0 %408, %v365
    %v410 = vpop.permute.xlu0 %409
    %411 = vset.pattern.permute.xlu0 0
    %412 = vperm.xlu0 %411, %v366
    %v413 = vpop.permute.xlu0 %412
    %414 = vset.pattern.permute.xlu0 0
    %415 = vperm.xlu0 %414, %v367
    %v416 = vpop.permute.xlu0 %415
    %417 = vset.pattern.permute.xlu0 0
    %418 = vperm.xlu0 %417, %v368
    %v419 = vpop.permute.xlu0 %418
    %420 = vset.pattern.permute.xlu0 0
    %421 = vperm.xlu0 %420, %v369
    %v422 = vpop.permute.xlu0 %421
    %423 = vset.pattern.permute.xlu0 0
    %424 = vperm.xlu0 %423, %v370
    %v425 = vpop.permute.xlu0 %424
    %426 = vset.pattern.permute.xlu0 0
    %427 = vperm.xlu0 %426, %v371
    %v428 = vpop.permute.xlu0 %427
    %429 = vset.pattern.permute.xlu0 0
    %430 = vperm.xlu0 %429, %v372
    %v431 = vpop.permute.xlu0 %430
    %432 = vset.pattern.permute.xlu0 0
    %433 = vperm.xlu0 %432, %v373
    %v434 = vpop.permute.xlu0 %433
    %435 = vset.pattern.permute.xlu0 0
    %436 = vperm.xlu0 %435, %v374
    %v437 = vpop.permute.xlu0 %436
    %438 = vset.pattern.permute.xlu0 0
    %439 = vperm.xlu0 %438, %v375
    %v440 = vpop.permute.xlu0 %439
    %441 = vset.pattern.permute.xlu0 0
    %442 = vperm.xlu0 %441, %v376
    %v443 = vpop.permute.xlu0 %442
    %444 = vset.pattern.permute.xlu0 0
    %445 = vperm.xlu0 %444, %v377
    %v446 = vpop.permute.xlu0 %445
    %447 = vset.pattern.permute.xlu0 0
    %448 = vperm.xlu0 %447, %v378
    %v449 = vpop.permute.xlu0 %448
    %450 = vset.pattern.permute.xlu0 0
    %451 = vperm.xlu0 %450, %v379
    %v452 = vpop.permute.xlu0 %451
    %453 = vset.pattern.permute.xlu0 0
    %454 = vperm.xlu0 %453, %v380
    %v455 = vpop.permute.xlu0 %454
    %456 = vset.pattern.permute.xlu0 0
    %457 = vperm.xlu0 %456, %v381
    %v458 = vpop.permute.xlu0 %457
    %459 = vset.pattern.permute.xlu0 0
    %460 = vperm.xlu0 %459, %v382
    %v461 = vpop.permute.xlu0 %460
    %462 = vset.pattern.permute.xlu0 0
    %463 = vperm.xlu0 %462, %v383
    %v464 = vpop.permute.xlu0 %463
    %465 = vset.pattern.permute.xlu0 0
    %466 = vperm.xlu0 %465, %v384
    %v467 = vpop.permute.xlu0 %466
    %468 = vset.pattern.permute.xlu0 0
    %469 = vperm.xlu0 %468, %v385
    %v470 = vpop.permute.xlu0 %469
    %471 = vset.pattern.permute.xlu0 0
    %472 = vperm.xlu0 %471, %v386
    %v473 = vpop.permute.xlu0 %472
    %474 = vset.pattern.permute.xlu0 0
    %475 = vperm.xlu0 %474, %v387
    %v476 = vpop.permute.xlu0 %475
    %477 = vset.pattern.permute.xlu0 0
    %478 = vperm.xlu0 %477, %v388
    %v479 = vpop.permute.xlu0 %478
    %480 = vset.pattern.permute.xlu0 0
    %481 = vperm.xlu0 %480, %v389
    %v482 = vpop.permute.xlu0 %481
    %483 = vset.pattern.permute.xlu0 0
    %484 = vperm.xlu0 %483, %v390
    %v485 = vpop.permute.xlu0 %484
    %486 = vset.pattern.permute.xlu0 0
    %487 = vperm.xlu0 %486, %v391
    %v488 = vpop.permute.xlu0 %487
    %v489 = vlaneseq
    %v490 = vshrl.u32 %v489, 7
    %v491 = vsub.s32 0, %v490
    %v492 = vrot.slane %v392, %v491
    %v493 = vlaneseq
    %v494 = vshrl.u32 %v493, 7
    %v495 = vsub.s32 1, %v494
    %v496 = vrot.slane %v392, %v495
    %vm497 = vcmp.eq.s32.totalorder %v395, %v492
    %vm498 = vcmp.eq.s32.totalorder %v395, %v496
    %vm499 = vcmp.eq.s32.totalorder %v398, %v492
    %vm500 = vcmp.eq.s32.totalorder %v398, %v496
    %vm501 = vcmp.eq.s32.totalorder %v401, %v492
    %vm502 = vcmp.eq.s32.totalorder %v401, %v496
    %vm503 = vcmp.eq.s32.totalorder %v404, %v492
    %vm504 = vcmp.eq.s32.totalorder %v404, %v496
    %vm505 = vcmp.eq.s32.totalorder %v407, %v492
    %vm506 = vcmp.eq.s32.totalorder %v407, %v496
    %vm507 = vcmp.eq.s32.totalorder %v410, %v492
    %vm508 = vcmp.eq.s32.totalorder %v410, %v496
    %vm509 = vcmp.eq.s32.totalorder %v413, %v492
    %vm510 = vcmp.eq.s32.totalorder %v413, %v496
    %vm511 = vcmp.eq.s32.totalorder %v416, %v492
    %vm512 = vcmp.eq.s32.totalorder %v416, %v496
    %vm513 = vcmp.eq.s32.totalorder %v419, %v492
    %vm514 = vcmp.eq.s32.totalorder %v419, %v496
    %vm515 = vcmp.eq.s32.totalorder %v422, %v492
    %vm516 = vcmp.eq.s32.totalorder %v422, %v496
    %vm517 = vcmp.eq.s32.totalorder %v425, %v492
    %vm518 = vcmp.eq.s32.totalorder %v425, %v496
    %vm519 = vcmp.eq.s32.totalorder %v428, %v492
    %vm520 = vcmp.eq.s32.totalorder %v428, %v496
    %vm521 = vcmp.eq.s32.totalorder %v431, %v492
    %vm522 = vcmp.eq.s32.totalorder %v431, %v496
    %vm523 = vcmp.eq.s32.totalorder %v434, %v492
    %vm524 = vcmp.eq.s32.totalorder %v434, %v496
    %vm525 = vcmp.eq.s32.totalorder %v437, %v492
    %vm526 = vcmp.eq.s32.totalorder %v437, %v496
    %vm527 = vcmp.eq.s32.totalorder %v440, %v492
    %vm528 = vcmp.eq.s32.totalorder %v440, %v496
    %vm529 = vcmp.eq.s32.totalorder %v443, %v492
    %vm530 = vcmp.eq.s32.totalorder %v443, %v496
    %vm531 = vcmp.eq.s32.totalorder %v446, %v492
    %vm532 = vcmp.eq.s32.totalorder %v446, %v496
    %vm533 = vcmp.eq.s32.totalorder %v449, %v492
    %vm534 = vcmp.eq.s32.totalorder %v449, %v496
    %vm535 = vcmp.eq.s32.totalorder %v452, %v492
    %vm536 = vcmp.eq.s32.totalorder %v452, %v496
    %vm537 = vcmp.eq.s32.totalorder %v455, %v492
    %vm538 = vcmp.eq.s32.totalorder %v455, %v496
    %vm539 = vcmp.eq.s32.totalorder %v458, %v492
    %vm540 = vcmp.eq.s32.totalorder %v458, %v496
    %vm541 = vcmp.eq.s32.totalorder %v461, %v492
    %vm542 = vcmp.eq.s32.totalorder %v461, %v496
    %vm543 = vcmp.eq.s32.totalorder %v464, %v492
    %vm544 = vcmp.eq.s32.totalorder %v464, %v496
    %vm545 = vcmp.eq.s32.totalorder %v467, %v492
    %vm546 = vcmp.eq.s32.totalorder %v467, %v496
    %vm547 = vcmp.eq.s32.totalorder %v470, %v492
    %vm548 = vcmp.eq.s32.totalorder %v470, %v496
    %vm549 = vcmp.eq.s32.totalorder %v473, %v492
    %vm550 = vcmp.eq.s32.totalorder %v473, %v496
    %vm551 = vcmp.eq.s32.totalorder %v476, %v492
    %vm552 = vcmp.eq.s32.totalorder %v476, %v496
    %vm553 = vcmp.eq.s32.totalorder %v479, %v492
    %vm554 = vcmp.eq.s32.totalorder %v479, %v496
    %vm555 = vcmp.eq.s32.totalorder %v482, %v492
    %vm556 = vcmp.eq.s32.totalorder %v482, %v496
    %vm557 = vcmp.eq.s32.totalorder %v485, %v492
    %vm558 = vcmp.eq.s32.totalorder %v485, %v496
    %vm559 = vcmp.eq.s32.totalorder %v488, %v492
    %vm560 = vcmp.eq.s32.totalorder %v488, %v496
    %v561 = vsel %vm497, 1, 0
    %v562 = vsel %vm498, 1, 0
    %v563 = vsel %vm499, 1, 0
    %v564 = vsel %vm500, 1, 0
    %v565 = vsel %vm501, 1, 0
    %v566 = vsel %vm502, 1, 0
    %v567 = vsel %vm503, 1, 0
    %v568 = vsel %vm504, 1, 0
    %v569 = vsel %vm505, 1, 0
    %v570 = vsel %vm506, 1, 0
    %v571 = vsel %vm507, 1, 0
    %v572 = vsel %vm508, 1, 0
    %v573 = vsel %vm509, 1, 0
    %v574 = vsel %vm510, 1, 0
    %v575 = vsel %vm511, 1, 0
    %v576 = vsel %vm512, 1, 0
    %v577 = vsel %vm513, 1, 0
    %v578 = vsel %vm514, 1, 0
    %v579 = vsel %vm515, 1, 0
    %v580 = vsel %vm516, 1, 0
    %v581 = vsel %vm517, 1, 0
    %v582 = vsel %vm518, 1, 0
    %v583 = vsel %vm519, 1, 0
    %v584 = vsel %vm520, 1, 0
    %v585 = vsel %vm521, 1, 0
    %v586 = vsel %vm522, 1, 0
    %v587 = vsel %vm523, 1, 0
    %v588 = vsel %vm524, 1, 0
    %v589 = vsel %vm525, 1, 0
    %v590 = vsel %vm526, 1, 0
    %v591 = vsel %vm527, 1, 0
    %v592 = vsel %vm528, 1, 0
    %v593 = vsel %vm529, 1, 0
    %v594 = vsel %vm530, 1, 0
    %v595 = vsel %vm531, 1, 0
    %v596 = vsel %vm532, 1, 0
    %v597 = vsel %vm533, 1, 0
    %v598 = vsel %vm534, 1, 0
    %v599 = vsel %vm535, 1, 0
    %v600 = vsel %vm536, 1, 0
    %v601 = vsel %vm537, 1, 0
    %v602 = vsel %vm538, 1, 0
    %v603 = vsel %vm539, 1, 0
    %v604 = vsel %vm540, 1, 0
    %v605 = vsel %vm541, 1, 0
    %v606 = vsel %vm542, 1, 0
    %v607 = vsel %vm543, 1, 0
    %v608 = vsel %vm544, 1, 0
    %v609 = vsel %vm545, 1, 0
    %v610 = vsel %vm546, 1, 0
    %v611 = vsel %vm547, 1, 0
    %v612 = vsel %vm548, 1, 0
    %v613 = vsel %vm549, 1, 0
    %v614 = vsel %vm550, 1, 0
    %v615 = vsel %vm551, 1, 0
    %v616 = vsel %vm552, 1, 0
    %v617 = vsel %vm553, 1, 0
    %v618 = vsel %vm554, 1, 0
    %v619 = vsel %vm555, 1, 0
    %v620 = vsel %vm556, 1, 0
    %v621 = vsel %vm557, 1, 0
    %v622 = vsel %vm558, 1, 0
    %v623 = vsel %vm559, 1, 0
    %v624 = vsel %vm560, 1, 0
    %v625 = vcvt.s32.f32 %v561
    %v626 = vcvt.s32.f32 %v562
    %v627 = vcvt.s32.f32 %v563
    %v628 = vcvt.s32.f32 %v564
    %v629 = vcvt.s32.f32 %v565
    %v630 = vcvt.s32.f32 %v566
    %v631 = vcvt.s32.f32 %v567
    %v632 = vcvt.s32.f32 %v568
    %v633 = vcvt.s32.f32 %v569
    %v634 = vcvt.s32.f32 %v570
    %v635 = vcvt.s32.f32 %v571
    %v636 = vcvt.s32.f32 %v572
    %v637 = vcvt.s32.f32 %v573
    %v638 = vcvt.s32.f32 %v574
    %v639 = vcvt.s32.f32 %v575
    %v640 = vcvt.s32.f32 %v576
    %v641 = vcvt.s32.f32 %v577
    %v642 = vcvt.s32.f32 %v578
    %v643 = vcvt.s32.f32 %v579
    %v644 = vcvt.s32.f32 %v580
    %v645 = vcvt.s32.f32 %v581
    %v646 = vcvt.s32.f32 %v582
    %v647 = vcvt.s32.f32 %v583
    %v648 = vcvt.s32.f32 %v584
    %v649 = vcvt.s32.f32 %v585
    %v650 = vcvt.s32.f32 %v586
    %v651 = vcvt.s32.f32 %v587
    %v652 = vcvt.s32.f32 %v588
    %v653 = vcvt.s32.f32 %v589
    %v654 = vcvt.s32.f32 %v590
    %v655 = vcvt.s32.f32 %v591
    %v656 = vcvt.s32.f32 %v592
    %v657 = vcvt.s32.f32 %v593
    %v658 = vcvt.s32.f32 %v594
    %v659 = vcvt.s32.f32 %v595
    %v660 = vcvt.s32.f32 %v596
    %v661 = vcvt.s32.f32 %v597
    %v662 = vcvt.s32.f32 %v598
    %v663 = vcvt.s32.f32 %v599
    %v664 = vcvt.s32.f32 %v600
    %v665 = vcvt.s32.f32 %v601
    %v666 = vcvt.s32.f32 %v602
    %v667 = vcvt.s32.f32 %v603
    %v668 = vcvt.s32.f32 %v604
    %v669 = vcvt.s32.f32 %v605
    %v670 = vcvt.s32.f32 %v606
    %v671 = vcvt.s32.f32 %v607
    %v672 = vcvt.s32.f32 %v608
    %v673 = vcvt.s32.f32 %v609
    %v674 = vcvt.s32.f32 %v610
    %v675 = vcvt.s32.f32 %v611
    %v676 = vcvt.s32.f32 %v612
    %v677 = vcvt.s32.f32 %v613
    %v678 = vcvt.s32.f32 %v614
    %v679 = vcvt.s32.f32 %v615
    %v680 = vcvt.s32.f32 %v616
    %v681 = vcvt.s32.f32 %v617
    %v682 = vcvt.s32.f32 %v618
    %v683 = vcvt.s32.f32 %v619
    %v684 = vcvt.s32.f32 %v620
    %v685 = vcvt.s32.f32 %v621
    %v686 = vcvt.s32.f32 %v622
    %v687 = vcvt.s32.f32 %v623
    %v688 = vcvt.s32.f32 %v624
    %v689 = vpack.c.bf16 %v627, %v625
    %v690 = vpack.c.bf16 %v628, %v626
    %v691 = vpack.c.bf16 %v631, %v629
    %v692 = vpack.c.bf16 %v632, %v630
    %v693 = vpack.c.bf16 %v635, %v633
    %v694 = vpack.c.bf16 %v636, %v634
    %v695 = vpack.c.bf16 %v639, %v637
    %v696 = vpack.c.bf16 %v640, %v638
    %v697 = vpack.c.bf16 %v643, %v641
    %v698 = vpack.c.bf16 %v644, %v642
    %v699 = vpack.c.bf16 %v647, %v645
    %v700 = vpack.c.bf16 %v648, %v646
    %v701 = vpack.c.bf16 %v651, %v649
    %v702 = vpack.c.bf16 %v652, %v650
    %v703 = vpack.c.bf16 %v655, %v653
    %v704 = vpack.c.bf16 %v656, %v654
    %v705 = vpack.c.bf16 %v659, %v657
    %v706 = vpack.c.bf16 %v660, %v658
    %v707 = vpack.c.bf16 %v663, %v661
    %v708 = vpack.c.bf16 %v664, %v662
    %v709 = vpack.c.bf16 %v667, %v665
    %v710 = vpack.c.bf16 %v668, %v666
    %v711 = vpack.c.bf16 %v671, %v669
    %v712 = vpack.c.bf16 %v672, %v670
    %v713 = vpack.c.bf16 %v675, %v673
    %v714 = vpack.c.bf16 %v676, %v674
    %v715 = vpack.c.bf16 %v679, %v677
    %v716 = vpack.c.bf16 %v680, %v678
    %v717 = vpack.c.bf16 %v683, %v681
    %v718 = vpack.c.bf16 %v684, %v682
    %v719 = vpack.c.bf16 %v687, %v685
    %v720 = vpack.c.bf16 %v688, %v686
    %v721 = vld [vmem:[%s3] sm:$0xff]
    %v722 = vld [vmem:[%s3 + $0x8] sm:$0xff]
    %v725 = vunpack.c.l.b16 %v721
    %v726 = vunpack.c.h.b16 %v721
    %v727 = vunpack.c.l.b16 %v722
    %v728 = vunpack.c.h.b16 %v722
    %v729 = vpack.c.b16 %v727, %v725
    %v730 = vpack.c.b16 %v728, %v726
    %v733 = vmul.bf16 %v729, %v689
    %v734 = vmul.bf16 %v730, %v690
    %v735 = vmul.bf16 %v729, %v691
    %v736 = vmul.bf16 %v730, %v692
    %v737 = vmul.bf16 %v729, %v693
    %v738 = vmul.bf16 %v730, %v694
    %v739 = vmul.bf16 %v729, %v695
    %v740 = vmul.bf16 %v730, %v696
    %v741 = vmul.bf16 %v729, %v697
    %v742 = vmul.bf16 %v730, %v698
    %v743 = vmul.bf16 %v729, %v699
    %v744 = vmul.bf16 %v730, %v700
    %v745 = vmul.bf16 %v729, %v701
    %v746 = vmul.bf16 %v730, %v702
    %v747 = vmul.bf16 %v729, %v703
    %v748 = vmul.bf16 %v730, %v704
    %v749 = vmul.bf16 %v729, %v705
    %v750 = vmul.bf16 %v730, %v706
    %v751 = vmul.bf16 %v729, %v707
    %v752 = vmul.bf16 %v730, %v708
    %v753 = vmul.bf16 %v729, %v709
    %v754 = vmul.bf16 %v730, %v710
    %v755 = vmul.bf16 %v729, %v711
    %v756 = vmul.bf16 %v730, %v712
    %v757 = vmul.bf16 %v729, %v713
    %v758 = vmul.bf16 %v730, %v714
    %v759 = vmul.bf16 %v729, %v715
    %v760 = vmul.bf16 %v730, %v716
    %v761 = vmul.bf16 %v729, %v717
    %v762 = vmul.bf16 %v730, %v718
    %v763 = vmul.bf16 %v729, %v719
    %v764 = vmul.bf16 %v730, %v720
    %s765 = scalar_lea.vmem %s3, 16
    %v766 = vld [vmem:[%s765] sm:$0xff]
    %v767 = vld [vmem:[%s765 + $0x8] sm:$0xff]
    %v770 = vunpack.c.l.b16 %v766
    %v771 = vunpack.c.h.b16 %v766
    %v772 = vunpack.c.l.b16 %v767
    %v773 = vunpack.c.h.b16 %v767
    %v774 = vpack.c.b16 %v772, %v770
    %v775 = vpack.c.b16 %v773, %v771
    %v778 = vmul.bf16 %v774, %v689
    %v779 = vmul.bf16 %v775, %v690
    %v780 = vmul.bf16 %v774, %v691
    %v781 = vmul.bf16 %v775, %v692
    %v782 = vmul.bf16 %v774, %v693
    %v783 = vmul.bf16 %v775, %v694
    %v784 = vmul.bf16 %v774, %v695
    %v785 = vmul.bf16 %v775, %v696
    %v786 = vmul.bf16 %v774, %v697
    %v787 = vmul.bf16 %v775, %v698
    %v788 = vmul.bf16 %v774, %v699
    %v789 = vmul.bf16 %v775, %v700
    %v790 = vmul.bf16 %v774, %v701
    %v791 = vmul.bf16 %v775, %v702
    %v792 = vmul.bf16 %v774, %v703
    %v793 = vmul.bf16 %v775, %v704
    %v794 = vmul.bf16 %v774, %v705
    %v795 = vmul.bf16 %v775, %v706
    %v796 = vmul.bf16 %v774, %v707
    %v797 = vmul.bf16 %v775, %v708
    %v798 = vmul.bf16 %v774, %v709
    %v799 = vmul.bf16 %v775, %v710
    %v800 = vmul.bf16 %v774, %v711
    %v801 = vmul.bf16 %v775, %v712
    %v802 = vmul.bf16 %v774, %v713
    %v803 = vmul.bf16 %v775, %v714
    %v804 = vmul.bf16 %v774, %v715
    %v805 = vmul.bf16 %v775, %v716
    %v806 = vmul.bf16 %v774, %v717
    %v807 = vmul.bf16 %v775, %v718
    %v808 = vmul.bf16 %v774, %v719
    %v809 = vmul.bf16 %v775, %v720
    %s810 = scalar_lea.vmem %s3, 32
    %v811 = vld [vmem:[%s810] sm:$0xff]
    %v812 = vld [vmem:[%s810 + $0x8] sm:$0xff]
    %v815 = vunpack.c.l.b16 %v811
    %v816 = vunpack.c.h.b16 %v811
    %v817 = vunpack.c.l.b16 %v812
    %v818 = vunpack.c.h.b16 %v812
    %v819 = vpack.c.b16 %v817, %v815
    %v820 = vpack.c.b16 %v818, %v816
    %v823 = vmul.bf16 %v819, %v689
    %v824 = vmul.bf16 %v820, %v690
    %v825 = vmul.bf16 %v819, %v691
    %v826 = vmul.bf16 %v820, %v692
    %v827 = vmul.bf16 %v819, %v693
    %v828 = vmul.bf16 %v820, %v694
    %v829 = vmul.bf16 %v819, %v695
    %v830 = vmul.bf16 %v820, %v696
    %v831 = vmul.bf16 %v819, %v697
    %v832 = vmul.bf16 %v820, %v698
    %v833 = vmul.bf16 %v819, %v699
    %v834 = vmul.bf16 %v820, %v700
    %v835 = vmul.bf16 %v819, %v701
    %v836 = vmul.bf16 %v820, %v702
    %v837 = vmul.bf16 %v819, %v703
    %v838 = vmul.bf16 %v820, %v704
    %v839 = vmul.bf16 %v819, %v705
    %v840 = vmul.bf16 %v820, %v706
    %v841 = vmul.bf16 %v819, %v707
    %v842 = vmul.bf16 %v820, %v708
    %v843 = vmul.bf16 %v819, %v709
    %v844 = vmul.bf16 %v820, %v710
    %v845 = vmul.bf16 %v819, %v711
    %v846 = vmul.bf16 %v820, %v712
    %v847 = vmul.bf16 %v819, %v713
    %v848 = vmul.bf16 %v820, %v714
    %v849 = vmul.bf16 %v819, %v715
    %v850 = vmul.bf16 %v820, %v716
    %v851 = vmul.bf16 %v819, %v717
    %v852 = vmul.bf16 %v820, %v718
    %v853 = vmul.bf16 %v819, %v719
    %v854 = vmul.bf16 %v820, %v720
    %855 = vmatprep.subr.bf16.mxu0 %v748
    %856 = vmatpush1.bf16.msra.mxu0 %v747
    %857 = vmatprep.subr.bf16.mxu0 %v746
    %858 = vmatpush1.bf16.msra.mxu0 %v745
    %859 = vmatprep.subr.bf16.mxu0 %v744
    %860 = vmatpush1.bf16.msra.mxu0 %v743
    %861 = vmatprep.subr.bf16.mxu0 %v742
    %862 = vmatpush1.bf16.msra.mxu0 %v741
    %863 = vmatprep.subr.bf16.mxu0 %v740
    %864 = vmatpush1.bf16.msra.mxu0 %v739
    %865 = vmatprep.subr.bf16.mxu0 %v738
    %866 = vmatpush1.bf16.msra.mxu0 %v737
    %867 = vmatprep.subr.bf16.mxu0 %v736
    %868 = vmatpush1.bf16.msra.mxu0 %v735
    %869 = vmatprep.subr.bf16.mxu0 %v734
    %870 = vmatpush1.bf16.msra.mxu0 %v733
    %871 = vmatprep.subr.bf16.mxu0 %v764
    %872 = vmatpush2.bf16.msra.mxu0 %v763
    %873 = vmatprep.subr.bf16.mxu0 %v762
    %874 = vmatpush2.bf16.msra.mxu0 %v761
    %875 = vmatprep.subr.bf16.mxu0 %v760
    %876 = vmatpush2.bf16.msra.mxu0 %v759
    %877 = vmatprep.subr.bf16.mxu0 %v758
    %878 = vmatpush2.bf16.msra.mxu0 %v757
    %879 = vmatprep.subr.bf16.mxu0 %v756
    %880 = vmatpush2.bf16.msra.mxu0 %v755
    %881 = vmatprep.subr.bf16.mxu0 %v754
    %882 = vmatpush2.bf16.msra.mxu0 %v753
    %883 = vmatprep.subr.bf16.mxu0 %v752
    %884 = vmatpush2.bf16.msra.mxu0 %v751
    %885 = vmatprep.subr.bf16.mxu0 %v750
    %886 = vmatpush2.bf16.msra.mxu0 %v749
    %887 = vmatprep.mubr.bf16.mxu0 %v355
    %888 = vmatmul.mubr.bf16.gmra.mxu0 %v354
    %v889 = vpop.f32.mrf.mxu0
    %v890 = vadd.f32 0.0, %v889
    %v891 = vpop.f32.mrf.mxu0
    %v892 = vadd.f32 0.0, %v891
    %v893 = vpop.f32.mrf.mxu0
    %v894 = vadd.f32 0.0, %v893
    %v895 = vpop.f32.mrf.mxu0
    %v896 = vadd.f32 0.0, %v895
    %897 = vdwg.mxu0
    %898 = vmatprep.subr.bf16.mxu0 %v793
    %899 = vmatpush1.bf16.msra.mxu0 %v792
    %900 = vmatprep.subr.bf16.mxu0 %v791
    %901 = vmatpush1.bf16.msra.mxu0 %v790
    %902 = vmatprep.subr.bf16.mxu0 %v789
    %903 = vmatpush1.bf16.msra.mxu0 %v788
    %904 = vmatprep.subr.bf16.mxu0 %v787
    %905 = vmatpush1.bf16.msra.mxu0 %v786
    %906 = vmatprep.subr.bf16.mxu0 %v785
    %907 = vmatpush1.bf16.msra.mxu0 %v784
    %908 = vmatprep.subr.bf16.mxu0 %v783
    %909 = vmatpush1.bf16.msra.mxu0 %v782
    %910 = vmatprep.subr.bf16.mxu0 %v781
    %911 = vmatpush1.bf16.msra.mxu0 %v780
    %912 = vmatprep.subr.bf16.mxu0 %v779
    %913 = vmatpush1.bf16.msra.mxu0 %v778
    %914 = vmatprep.subr.bf16.mxu0 %v809
    %915 = vmatpush2.bf16.msra.mxu0 %v808
    %916 = vmatprep.subr.bf16.mxu0 %v807
    %917 = vmatpush2.bf16.msra.mxu0 %v806
    %918 = vmatprep.subr.bf16.mxu0 %v805
    %919 = vmatpush2.bf16.msra.mxu0 %v804
    %920 = vmatprep.subr.bf16.mxu0 %v803
    %921 = vmatpush2.bf16.msra.mxu0 %v802
    %922 = vmatprep.subr.bf16.mxu0 %v801
    %923 = vmatpush2.bf16.msra.mxu0 %v800
    %924 = vmatprep.subr.bf16.mxu0 %v799
    %925 = vmatpush2.bf16.msra.mxu0 %v798
    %926 = vmatprep.subr.bf16.mxu0 %v797
    %927 = vmatpush2.bf16.msra.mxu0 %v796
    %928 = vmatprep.subr.bf16.mxu0 %v795
    %929 = vmatpush2.bf16.msra.mxu0 %v794
    %930 = vmatprep.mubr.bf16.mxu0 %v357
    %931 = vmatmul.mubr.bf16.gmra.mxu0 %v356
    %v932 = vpop.f32.mrf.mxu0
    %v933 = vadd.f32 %v890, %v932
    %v934 = vpop.f32.mrf.mxu0
    %v935 = vadd.f32 %v892, %v934
    %v936 = vpop.f32.mrf.mxu0
    %v937 = vadd.f32 %v894, %v936
    %v938 = vpop.f32.mrf.mxu0
    %v939 = vadd.f32 %v896, %v938
    %940 = vdwg.mxu0
    %941 = vmatprep.subr.bf16.mxu0 %v838
    %942 = vmatpush1.bf16.msra.mxu0 %v837
    %943 = vmatprep.subr.bf16.mxu0 %v836
    %944 = vmatpush1.bf16.msra.mxu0 %v835
    %945 = vmatprep.subr.bf16.mxu0 %v834
    %946 = vmatpush1.bf16.msra.mxu0 %v833
    %947 = vmatprep.subr.bf16.mxu0 %v832
    %948 = vmatpush1.bf16.msra.mxu0 %v831
    %949 = vmatprep.subr.bf16.mxu0 %v830
    %950 = vmatpush1.bf16.msra.mxu0 %v829
    %951 = vmatprep.subr.bf16.mxu0 %v828
    %952 = vmatpush1.bf16.msra.mxu0 %v827
    %953 = vmatprep.subr.bf16.mxu0 %v826
    %954 = vmatpush1.bf16.msra.mxu0 %v825
    %955 = vmatprep.subr.bf16.mxu0 %v824
    %956 = vmatpush1.bf16.msra.mxu0 %v823
    %957 = vmatprep.subr.bf16.mxu0 %v854
    %958 = vmatpush2.bf16.msra.mxu0 %v853
    %959 = vmatprep.subr.bf16.mxu0 %v852
    %960 = vmatpush2.bf16.msra.mxu0 %v851
    %961 = vmatprep.subr.bf16.mxu0 %v850
    %962 = vmatpush2.bf16.msra.mxu0 %v849
    %963 = vmatprep.subr.bf16.mxu0 %v848
    %964 = vmatpush2.bf16.msra.mxu0 %v847
    %965 = vmatprep.subr.bf16.mxu0 %v846
    %966 = vmatpush2.bf16.msra.mxu0 %v845
    %967 = vmatprep.subr.bf16.mxu0 %v844
    %968 = vmatpush2.bf16.msra.mxu0 %v843
    %969 = vmatprep.subr.bf16.mxu0 %v842
    %970 = vmatpush2.bf16.msra.mxu0 %v841
    %971 = vmatprep.subr.bf16.mxu0 %v840
    %972 = vmatpush2.bf16.msra.mxu0 %v839
    %973 = vmatprep.mubr.bf16.mxu0 %v359
    %974 = vmatmul.mubr.bf16.gmra.mxu0 %v358
    %v975 = vpop.f32.mrf.mxu0
    %v976 = vadd.f32 %v933, %v975
    %v977 = vpop.f32.mrf.mxu0
    %v978 = vadd.f32 %v935, %v977
    %v979 = vpop.f32.mrf.mxu0
    %v980 = vadd.f32 %v937, %v979
    %v981 = vpop.f32.mrf.mxu0
    %v982 = vadd.f32 %v939, %v981
    %983 = vdwg.mxu0
    %v984 = vld [vmem:[%s7] sm:$0x3]
    %v986 = vlaneseq
    %v987 = vshrl.u32 %v986, 7
    %v988 = vsub.s32 0, %v987
    %v989 = vrot.slane %v984, %v988
    %v990 = vlaneseq
    %v991 = vshrl.u32 %v990, 7
    %v992 = vsub.s32 1, %v991
    %v993 = vrot.slane %v984, %v992
    %v996 = vadd.f32 %v44, %v989
    %v997 = vadd.f32 %v45, %v993
    %v998 = vadd.f32 %v46, %v989
    %v999 = vadd.f32 %v47, %v993
    %v1000 = vadd.f32 %v996, %v976
    %v1001 = vadd.f32 %v997, %v978
    %v1002 = vadd.f32 %v998, %v980
    %v1003 = vadd.f32 %v999, %v982
    %v1004 = vmax.f32 %v1000, 0.0
    %v1005 = vmax.f32 %v1001, 0.0
    %v1006 = vmax.f32 %v1002, 0.0
    %v1007 = vmax.f32 %v1003, 0.0
    %1008 = vst [vmem:[#allocation5] sm:$0xff] %v1004
    %1009 = vst [vmem:[#allocation5 + $0x8] sm:$0xff] %v1005
    %1010 = vst [vmem:[#allocation5 + $0x10] sm:$0xff] %v1006
    %1011 = vst [vmem:[#allocation5 + $0x18] sm:$0xff] %v1007
    // Predicated region
    $region38: #{tpu_custom_call.1} parent=1 // pred_check
      _
    $region39: #{tpu_custom_call.1} parent=1 // pred_check_branch
      %1013 = sbr.rel (0) target = $region41
    $region40: #{tpu_custom_call.1} parent=1 // pred_region
      %s1015 = ssub.s32 512, 512
      %1016 = vsyncadd [#allocation4], %s1015
      %s1017 = sshll.u32 [#allocation5], 4
      %s1018 = int_to_ptr.vmem [resolvable:$true] %s1017
      %1023 = dma.vmem_to_hbm [thread:$0]  %s1018, 512, %s8, [#allocation4], 256, 256, 16
    $region41: #{tpu_custom_call.1} parent=1 // pred_fallthru
      _
    // Predicated region
    $region42: #{tpu_custom_call.1} parent=1 // pred_check
      _
    $region43: #{tpu_custom_call.1} parent=1 // pred_check_branch
      %1025 = sbr.rel (0) target = $region45
    $region44: #{tpu_custom_call.1} parent=1 // pred_region
      %1026 = dma.done [#allocation4], 512
    $region45: #{tpu_custom_call.1} parent=1 // pred_fallthru
      _
    %1027 = vsyncpa [#allocation3], 1
    %1028 = vsyncpa [#allocation4], 1

</llo_original>
